<compile_context>
chip_gen: v7x
topology: tpu7x:2x2x1
jax: 0.10.0
libtpu: 0.0.40
codegen_flags: <defaults>
</compile_context>

<pallas_src>
import functools

import jax
import jax.numpy as jnp
from jax import lax
from jax.experimental import pallas as pl
from jax.experimental.pallas import tpu as pltpu


def _conv_relu_kernel(x_ref, w_ref, b_ref, o_ref, patches_ref, *, H, W, KH, KW):
    # x_ref:       (NB, C, H*W)        NB batch elements, flat spatial on lanes
    # w_ref:       (O, KH*KW*C)        weight[o, c, kh, kw] at col (kh*KW + kw)*C + c
    # b_ref:       (O, 1)              bias
    # o_ref:       (NB, O, H*W)        lane-dense output block
    # patches_ref: (NB, KH*KW*C, H*W)  f32 im2col tile, fed straight to the MXU
    NB, C, HW = x_ref.shape
    O = o_ref.shape[1]
    pad = 1  # module uses padding=1 ("same" conv for 3x3)

    # Column coordinate of every flat-spatial lane (left/right padding masks only;
    # top/bottom padding is supplied by the never-overwritten zero border lanes).
    lane = lax.broadcasted_iota(jnp.int32, (1, HW), 1)
    if (W & (W - 1)) == 0:          # power-of-two width: cheap and
        col = lane & (W - 1)
    else:
        col = lane % W

    wmat = w_ref[...].astype(jnp.float32)                              # (O, KH*KW*C)
    bias = jnp.broadcast_to(b_ref[...], (O, HW)).astype(jnp.float32)   # hoisted

    for n in range(NB):                                   # static, fully unrolled
        xc = x_ref[n].astype(jnp.float32)                 # (C, HW)
        for kh in range(KH):
            dy = kh - pad
            for kw in range(KW):
                dx = kw - pad
                d = dy * W + dx                           # static lane shift
                r0 = (kh * KW + kw) * C                   # tap's row block in im2col
                j0 = max(0, -d)                           # dest lanes with a valid row
                j1 = min(HW, HW - d)
                src = xc[:, j0 + d:j1 + d]                # (C, j1-j0), static slice
                if dx != 0:                               # left/right zero padding
                    valid = (col + dx >= 0) & (col + dx < W)
                    src = jnp.where(valid[:, j0:j1], src, 0.0)
                patches_ref[n, r0:r0 + C, j0:j1] = src
                # Top/bottom (and corner) zero padding: the uncovered border lanes.
                if j0 > 0:
                    patches_ref[n, r0:r0 + C, 0:j0] = jnp.zeros((C, j0), jnp.float32)
                if j1 < HW:
                    patches_ref[n, r0:r0 + C, j1:HW] = jnp.zeros((C, HW - j1), jnp.float32)

        # One MXU matmul does the whole KH*KW*C contraction (K = 36 here).
        acc = jnp.dot(wmat, patches_ref[n], preferred_element_type=jnp.float32)
        o_ref[n] = jnp.maximum(acc + bias, 0.0).astype(o_ref.dtype)


def _pick_batch_block(n_batch: int) -> int:
    """Batch elements per grid step (collapse the grid on single-TC chips)."""
    kind = ""
    try:
        kind = jax.devices()[0].device_kind.lower()
    except Exception:
        pass
    if "v7" in kind and n_batch >= 2:
        # 2 TensorCores per chip: keep a batch grid so "parallel" shards it; give
        # each core a single (multi-element) step when the batch splits evenly.
        return n_batch // 2 if n_batch % 2 == 0 else 1
    # v5e / v6e: single TC -> the grid is a serial loop and the ~600-cycle
    # per-step pipeline overhead dwarfs this body; collapse to one step.
    return n_batch


def decoder_module_forward(x_nchw, weight_oihw, bias):
    """Conv2d(C_in, C_out, kernel_size=3, padding=1) + ReLU. NCHW in / NCHW out."""
    N, C, H, W = x_nchw.shape
    O, C_w, KH, KW = weight_oihw.shape
    assert C_w == C
    assert KH == 3 and KW == 3, "kernel written for kernel_size=3, padding=1 (same conv)"
    HW = H * W

    # Free reshapes for the big tensors; only the tiny weight is re-laid-out to
    # tap-outer / channel-inner so it matches the im2col row order.
    x_flat = x_nchw.reshape(N, C, HW)
    w_flat = weight_oihw.transpose(0, 2, 3, 1).reshape(O, KH * KW * C).astype(jnp.float32)
    b_col = bias.reshape(O, 1).astype(jnp.float32)

    NB = _pick_batch_block(N)
    grid = (N // NB,)

    kernel = functools.partial(_conv_relu_kernel, H=H, W=W, KH=KH, KW=KW)

    itemsize = jnp.dtype(x_nchw.dtype).itemsize
    cost = pl.CostEstimate(
        flops=2 * N * O * C * KH * KW * HW,
        transcendentals=0,
        bytes_accessed=(N * C * HW + N * O * HW) * itemsize
        + (O * C * KH * KW + O) * 4,
    )

    # TODO(synk): for large C*H*W, tile H (1-row halo) so per-step blocks + the
    # im2col scratch stay under the ~32 MiB scoped VMEM default; irrelevant here
    # (~0.1 MiB per step).
    out_flat = pl.pallas_call(
        kernel,
        out_shape=jax.ShapeDtypeStruct((N, O, HW), x_nchw.dtype),
        grid_spec=pltpu.PrefetchScalarGridSpec(
            num_scalar_prefetch=0,
            grid=grid,
            in_specs=[
                pl.BlockSpec((NB, C, HW), lambda g: (g, 0, 0)),
                pl.BlockSpec((O, KH * KW * C), lambda g: (0, 0)),
                pl.BlockSpec((O, 1), lambda g: (0, 0)),
            ],
            out_specs=pl.BlockSpec((NB, O, HW), lambda g: (g, 0, 0)),
            scratch_shapes=[pltpu.VMEM((NB, KH * KW * C, HW), jnp.float32)],
        ),
        compiler_params=pltpu.CompilerParams(
            dimension_semantics=("parallel",)),
        cost_estimate=cost,
    )(x_flat, w_flat, b_col)

    # (N, O, H*W) is already NCHW-ordered: final reshape is free (no transpose).
    return out_flat.reshape(N, O, H, W)


if __name__ == "__main__":
    # Shapes consistent with the module: input_size=4, output_size=8, kernel_size=3
    N, C_in, H, W = 2, 4, 16, 16
    C_out, K = 8, 3

    key = jax.random.PRNGKey(0)
    kx, kw, kb = jax.random.split(key, 3)

    x = jax.random.normal(kx, (N, C_in, H, W), dtype=jnp.float32)
    # Deterministic synthetic params; shapes match nn.Conv2d(C_in, C_out, 3, padding=1)
    weight = jax.random.normal(kw, (C_out, C_in, K, K), dtype=jnp.float32) * 0.1
    bias = jax.random.normal(kb, (C_out,), dtype=jnp.float32) * 0.1

    out = jax.jit(decoder_module_forward)(x, weight, bias)
    out = jax.block_until_ready(out)

    # Reference check against XLA conv + relu.
    ref = lax.conv_general_dilated(
        x, weight, window_strides=(1, 1), padding=((1, 1), (1, 1)),
        dimension_numbers=("NCHW", "OIHW", "NCHW"))
    ref = jnp.maximum(ref + bias.reshape(1, C_out, 1, 1), 0.0)

    assert out.shape == (N, C_out, H, W), out.shape
    assert jnp.allclose(out, ref, atol=1e-4, rtol=1e-4), "mismatch vs reference"
    print("KERNEL_OK")
</pallas_src>

<mosaic_0001>
module attributes {stable_mosaic.version = 11 : i64} {
  func.func @_conv_relu_kernel(%arg0: i32, %arg1: memref<2x4x256xf32, #tpu.memory_space<vmem>>, %arg2: memref<8x36xf32, #tpu.memory_space<vmem>>, %arg3: memref<8x1xf32, #tpu.memory_space<vmem>>, %arg4: memref<2x8x256xf32, #tpu.memory_space<vmem>>, %arg5: memref<2x36x256xf32, #tpu.memory_space<vmem>>) attributes {dimension_semantics = [#tpu.dimension_semantics<parallel>], iteration_bounds = array<i64: 1>, scalar_prefetch = 0 : i64, scratch_operands = 1 : i64, tpu.core_type = #tpu.core_type<tc>, window_params = [{transform_indices = @transform_0, window_bounds = array<i64: 2, 4, 256>}, {pipeline_mode = #tpu.pipeline_mode<synchronous>, transform_indices = @transform_1, window_bounds = array<i64: 8, 36>}, {pipeline_mode = #tpu.pipeline_mode<synchronous>, transform_indices = @transform_2, window_bounds = array<i64: 8, 1>}, {transform_indices = @transform_3, window_bounds = array<i64: 2, 8, 256>}]} {
    %0 = tpu.iota {dimensions = array<i32: 1>} : vector<1x256xi32>
    %c15_i32 = arith.constant 15 : i32
    %1 = vector.broadcast %c15_i32 : i32 to vector<1x256xi32>
    %2 = arith.andi %0, %1 : vector<1x256xi32>
    %c0 = arith.constant 0 : index
    %c0_0 = arith.constant 0 : index
    %3 = vector.load %arg2[%c0, %c0_0] : memref<8x36xf32, #tpu.memory_space<vmem>>, vector<8x36xf32>
    %c0_1 = arith.constant 0 : index
    %c0_2 = arith.constant 0 : index
    %4 = vector.load %arg3[%c0_1, %c0_2] : memref<8x1xf32, #tpu.memory_space<vmem>>, vector<8x1xf32>
    %5 = vector.shape_cast %4 : vector<8x1xf32> to vector<8x1xf32>
    %6 = vector.broadcast %5 : vector<8x1xf32> to vector<8x256xf32>
    %c0_3 = arith.constant 0 : index
    %c0_4 = arith.constant 0 : index
    %c0_5 = arith.constant 0 : index
    %7 = vector.load %arg1[%c0_3, %c0_4, %c0_5] : memref<2x4x256xf32, #tpu.memory_space<vmem>>, vector<1x4x256xf32>
    %8 = vector.shape_cast %7 : vector<1x4x256xf32> to vector<4x256xf32>
    %9 = vector.extract_strided_slice %8 {offsets = [0, 0], sizes = [4, 239], strides = [1, 1]} : vector<4x256xf32> to vector<4x239xf32>
    %c-1_i32 = arith.constant -1 : i32
    %10 = vector.broadcast %c-1_i32 : i32 to vector<1x256xi32>
    %11 = arith.addi %2, %10 : vector<1x256xi32>
    %c0_i32 = arith.constant 0 : i32
    %12 = vector.broadcast %c0_i32 : i32 to vector<1x256xi32>
    %13 = arith.cmpi sge, %11, %12 : vector<1x256xi32>
    %c-1_i32_6 = arith.constant -1 : i32
    %14 = vector.broadcast %c-1_i32_6 : i32 to vector<1x256xi32>
    %15 = arith.addi %2, %14 : vector<1x256xi32>
    %c16_i32 = arith.constant 16 : i32
    %16 = vector.broadcast %c16_i32 : i32 to vector<1x256xi32>
    %17 = arith.cmpi slt, %15, %16 : vector<1x256xi32>
    %18 = arith.andi %13, %17 : vector<1x256xi1>
    %19 = vector.extract_strided_slice %18 {offsets = [0, 17], sizes = [1, 239], strides = [1, 1]} : vector<1x256xi1> to vector<1x239xi1>
    %cst = arith.constant 0.000000e+00 : f32
    %20 = vector.shape_cast %19 : vector<1x239xi1> to vector<1x239xi1>
    %21 = vector.broadcast %20 : vector<1x239xi1> to vector<4x239xi1>
    %22 = vector.broadcast %cst : f32 to vector<4x239xf32>
    %23 = arith.select %21, %9, %22 : vector<4x239xi1>, vector<4x239xf32>
    %c0_7 = arith.constant 0 : index
    %c0_8 = arith.constant 0 : index
    %c17 = arith.constant 17 : index
    %24 = vector.load %arg5[%c0_7, %c0_8, %c17] : memref<2x36x256xf32, #tpu.memory_space<vmem>>, vector<1x4x239xf32>
    %25 = vector.shape_cast %24 : vector<1x4x239xf32> to vector<4x239xf32>
    %26 = vector.shape_cast %23 : vector<4x239xf32> to vector<1x4x239xf32>
    tpu.vector_store %arg5[%c0_7, %c0_8, %c17], %26 {strides = array<i32>} : memref<2x36x256xf32, #tpu.memory_space<vmem>>, vector<1x4x239xf32>,
    %cst_9 = arith.constant 0.000000e+00 : f32
    %27 = vector.broadcast %cst_9 : f32 to vector<4x17xf32>
    %c0_10 = arith.constant 0 : index
    %c0_11 = arith.constant 0 : index
    %c0_12 = arith.constant 0 : index
    %28 = vector.load %arg5[%c0_10, %c0_11, %c0_12] : memref<2x36x256xf32, #tpu.memory_space<vmem>>, vector<1x4x17xf32>
    %29 = vector.shape_cast %28 : vector<1x4x17xf32> to vector<4x17xf32>
    %30 = vector.shape_cast %27 : vector<4x17xf32> to vector<1x4x17xf32>
    tpu.vector_store %arg5[%c0_10, %c0_11, %c0_12], %30 {strides = array<i32>} : memref<2x36x256xf32, #tpu.memory_space<vmem>>, vector<1x4x17xf32>,
    %31 = vector.extract_strided_slice %8 {offsets = [0, 0], sizes = [4, 240], strides = [1, 1]} : vector<4x256xf32> to vector<4x240xf32>
    %c0_13 = arith.constant 0 : index
    %c4 = arith.constant 4 : index
    %c16 = arith.constant 16 : index
    %32 = vector.load %arg5[%c0_13, %c4, %c16] : memref<2x36x256xf32, #tpu.memory_space<vmem>>, vector<1x4x240xf32>
    %33 = vector.shape_cast %32 : vector<1x4x240xf32> to vector<4x240xf32>
    %34 = vector.shape_cast %31 : vector<4x240xf32> to vector<1x4x240xf32>
    tpu.vector_store %arg5[%c0_13, %c4, %c16], %34 {strides = array<i32>} : memref<2x36x256xf32, #tpu.memory_space<vmem>>, vector<1x4x240xf32>,
    %cst_14 = arith.constant 0.000000e+00 : f32
    %35 = vector.broadcast %cst_14 : f32 to vector<4x16xf32>
    %c0_15 = arith.constant 0 : index
    %c4_16 = arith.constant 4 : index
    %c0_17 = arith.constant 0 : index
    %36 = vector.load %arg5[%c0_15, %c4_16, %c0_17] : memref<2x36x256xf32, #tpu.memory_space<vmem>>, vector<1x4x16xf32>
    %37 = vector.shape_cast %36 : vector<1x4x16xf32> to vector<4x16xf32>
    %38 = vector.shape_cast %35 : vector<4x16xf32> to vector<1x4x16xf32>
    tpu.vector_store %arg5[%c0_15, %c4_16, %c0_17], %38 {strides = array<i32>} : memref<2x36x256xf32, #tpu.memory_space<vmem>>, vector<1x4x16xf32>,
    %39 = vector.extract_strided_slice %8 {offsets = [0, 0], sizes = [4, 241], strides = [1, 1]} : vector<4x256xf32> to vector<4x241xf32>
    %c1_i32 = arith.constant 1 : i32
    %40 = vector.broadcast %c1_i32 : i32 to vector<1x256xi32>
    %41 = arith.addi %2, %40 : vector<1x256xi32>
    %c0_i32_18 = arith.constant 0 : i32
    %42 = vector.broadcast %c0_i32_18 : i32 to vector<1x256xi32>
    %43 = arith.cmpi sge, %41, %42 : vector<1x256xi32>
    %c1_i32_19 = arith.constant 1 : i32
    %44 = vector.broadcast %c1_i32_19 : i32 to vector<1x256xi32>
    %45 = arith.addi %2, %44 : vector<1x256xi32>
    %c16_i32_20 = arith.constant 16 : i32
    %46 = vector.broadcast %c16_i32_20 : i32 to vector<1x256xi32>
    %47 = arith.cmpi slt, %45, %46 : vector<1x256xi32>
    %48 = arith.andi %43, %47 : vector<1x256xi1>
    %49 = vector.extract_strided_slice %48 {offsets = [0, 15], sizes = [1, 241], strides = [1, 1]} : vector<1x256xi1> to vector<1x241xi1>
    %cst_21 = arith.constant 0.000000e+00 : f32
    %50 = vector.shape_cast %49 : vector<1x241xi1> to vector<1x241xi1>
    %51 = vector.broadcast %50 : vector<1x241xi1> to vector<4x241xi1>
    %52 = vector.broadcast %cst_21 : f32 to vector<4x241xf32>
    %53 = arith.select %51, %39, %52 : vector<4x241xi1>, vector<4x241xf32>
    %c0_22 = arith.constant 0 : index
    %c8 = arith.constant 8 : index
    %c15 = arith.constant 15 : index
    %54 = vector.load %arg5[%c0_22, %c8, %c15] : memref<2x36x256xf32, #tpu.memory_space<vmem>>, vector<1x4x241xf32>
    %55 = vector.shape_cast %54 : vector<1x4x241xf32> to vector<4x241xf32>
    %56 = vector.shape_cast %53 : vector<4x241xf32> to vector<1x4x241xf32>
    tpu.vector_store %arg5[%c0_22, %c8, %c15], %56 {strides = array<i32>} : memref<2x36x256xf32, #tpu.memory_space<vmem>>, vector<1x4x241xf32>,
    %cst_23 = arith.constant 0.000000e+00 : f32
    %57 = vector.broadcast %cst_23 : f32 to vector<4x15xf32>
    %c0_24 = arith.constant 0 : index
    %c8_25 = arith.constant 8 : index
    %c0_26 = arith.constant 0 : index
    %58 = vector.load %arg5[%c0_24, %c8_25, %c0_26] : memref<2x36x256xf32, #tpu.memory_space<vmem>>, vector<1x4x15xf32>
    %59 = vector.shape_cast %58 : vector<1x4x15xf32> to vector<4x15xf32>
    %60 = vector.shape_cast %57 : vector<4x15xf32> to vector<1x4x15xf32>
    tpu.vector_store %arg5[%c0_24, %c8_25, %c0_26], %60 {strides = array<i32>} : memref<2x36x256xf32, #tpu.memory_space<vmem>>, vector<1x4x15xf32>,
    %61 = vector.extract_strided_slice %8 {offsets = [0, 0], sizes = [4, 255], strides = [1, 1]} : vector<4x256xf32> to vector<4x255xf32>
    %c-1_i32_27 = arith.constant -1 : i32
    %62 = vector.broadcast %c-1_i32_27 : i32 to vector<1x256xi32>
    %63 = arith.addi %2, %62 : vector<1x256xi32>
    %c0_i32_28 = arith.constant 0 : i32
    %64 = vector.broadcast %c0_i32_28 : i32 to vector<1x256xi32>
    %65 = arith.cmpi sge, %63, %64 : vector<1x256xi32>
    %c-1_i32_29 = arith.constant -1 : i32
    %66 = vector.broadcast %c-1_i32_29 : i32 to vector<1x256xi32>
    %67 = arith.addi %2, %66 : vector<1x256xi32>
    %c16_i32_30 = arith.constant 16 : i32
    %68 = vector.broadcast %c16_i32_30 : i32 to vector<1x256xi32>
    %69 = arith.cmpi slt, %67, %68 : vector<1x256xi32>
    %70 = arith.andi %65, %69 : vector<1x256xi1>
    %71 = vector.extract_strided_slice %70 {offsets = [0, 1], sizes = [1, 255], strides = [1, 1]} : vector<1x256xi1> to vector<1x255xi1>
    %cst_31 = arith.constant 0.000000e+00 : f32
    %72 = vector.shape_cast %71 : vector<1x255xi1> to vector<1x255xi1>
    %73 = vector.broadcast %72 : vector<1x255xi1> to vector<4x255xi1>
    %74 = vector.broadcast %cst_31 : f32 to vector<4x255xf32>
    %75 = arith.select %73, %61, %74 : vector<4x255xi1>, vector<4x255xf32>
    %c0_32 = arith.constant 0 : index
    %c12 = arith.constant 12 : index
    %c1 = arith.constant 1 : index
    %76 = vector.load %arg5[%c0_32, %c12, %c1] : memref<2x36x256xf32, #tpu.memory_space<vmem>>, vector<1x4x255xf32>
    %77 = vector.shape_cast %76 : vector<1x4x255xf32> to vector<4x255xf32>
    %78 = vector.shape_cast %75 : vector<4x255xf32> to vector<1x4x255xf32>
    tpu.vector_store %arg5[%c0_32, %c12, %c1], %78 {strides = array<i32>} : memref<2x36x256xf32, #tpu.memory_space<vmem>>, vector<1x4x255xf32>,
    %cst_33 = arith.constant 0.000000e+00 : f32
    %79 = vector.broadcast %cst_33 : f32 to vector<4x1xf32>
    %c0_34 = arith.constant 0 : index
    %c12_35 = arith.constant 12 : index
    %c0_36 = arith.constant 0 : index
    %80 = vector.load %arg5[%c0_34, %c12_35, %c0_36] : memref<2x36x256xf32, #tpu.memory_space<vmem>>, vector<1x4x1xf32>
    %81 = vector.shape_cast %80 : vector<1x4x1xf32> to vector<4x1xf32>
    %82 = vector.shape_cast %79 : vector<4x1xf32> to vector<1x4x1xf32>
    tpu.vector_store %arg5[%c0_34, %c12_35, %c0_36], %82 {strides = array<i32>} : memref<2x36x256xf32, #tpu.memory_space<vmem>>, vector<1x4x1xf32>,
    %c0_37 = arith.constant 0 : index
    %c16_38 = arith.constant 16 : index
    %c0_39 = arith.constant 0 : index
    %83 = vector.load %arg5[%c0_37, %c16_38, %c0_39] : memref<2x36x256xf32, #tpu.memory_space<vmem>>, vector<1x4x256xf32>
    %84 = vector.shape_cast %83 : vector<1x4x256xf32> to vector<4x256xf32>
    %85 = vector.shape_cast %8 : vector<4x256xf32> to vector<1x4x256xf32>
    tpu.vector_store %arg5[%c0_37, %c16_38, %c0_39], %85 {strides = array<i32>} : memref<2x36x256xf32, #tpu.memory_space<vmem>>, vector<1x4x256xf32>,
    %86 = vector.extract_strided_slice %8 {offsets = [0, 1], sizes = [4, 255], strides = [1, 1]} : vector<4x256xf32> to vector<4x255xf32>
    %c1_i32_40 = arith.constant 1 : i32
    %87 = vector.broadcast %c1_i32_40 : i32 to vector<1x256xi32>
    %88 = arith.addi %2, %87 : vector<1x256xi32>
    %c0_i32_41 = arith.constant 0 : i32
    %89 = vector.broadcast %c0_i32_41 : i32 to vector<1x256xi32>
    %90 = arith.cmpi sge, %88, %89 : vector<1x256xi32>
    %c1_i32_42 = arith.constant 1 : i32
    %91 = vector.broadcast %c1_i32_42 : i32 to vector<1x256xi32>
    %92 = arith.addi %2, %91 : vector<1x256xi32>
    %c16_i32_43 = arith.constant 16 : i32
    %93 = vector.broadcast %c16_i32_43 : i32 to vector<1x256xi32>
    %94 = arith.cmpi slt, %92, %93 : vector<1x256xi32>
    %95 = arith.andi %90, %94 : vector<1x256xi1>
    %96 = vector.extract_strided_slice %95 {offsets = [0, 0], sizes = [1, 255], strides = [1, 1]} : vector<1x256xi1> to vector<1x255xi1>
    %cst_44 = arith.constant 0.000000e+00 : f32
    %97 = vector.shape_cast %96 : vector<1x255xi1> to vector<1x255xi1>
    %98 = vector.broadcast %97 : vector<1x255xi1> to vector<4x255xi1>
    %99 = vector.broadcast %cst_44 : f32 to vector<4x255xf32>
    %100 = arith.select %98, %86, %99 : vector<4x255xi1>, vector<4x255xf32>
    %c0_45 = arith.constant 0 : index
    %c20 = arith.constant 20 : index
    %c0_46 = arith.constant 0 : index
    %101 = vector.load %arg5[%c0_45, %c20, %c0_46] : memref<2x36x256xf32, #tpu.memory_space<vmem>>, vector<1x4x255xf32>
    %102 = vector.shape_cast %101 : vector<1x4x255xf32> to vector<4x255xf32>
    %103 = vector.shape_cast %100 : vector<4x255xf32> to vector<1x4x255xf32>
    tpu.vector_store %arg5[%c0_45, %c20, %c0_46], %103 {strides = array<i32>} : memref<2x36x256xf32, #tpu.memory_space<vmem>>, vector<1x4x255xf32>,
    %cst_47 = arith.constant 0.000000e+00 : f32
    %104 = vector.broadcast %cst_47 : f32 to vector<4x1xf32>
    %c0_48 = arith.constant 0 : index
    %c20_49 = arith.constant 20 : index
    %c255 = arith.constant 255 : index
    %105 = vector.load %arg5[%c0_48, %c20_49, %c255] : memref<2x36x256xf32, #tpu.memory_space<vmem>>, vector<1x4x1xf32>
    %106 = vector.shape_cast %105 : vector<1x4x1xf32> to vector<4x1xf32>
    %107 = vector.shape_cast %104 : vector<4x1xf32> to vector<1x4x1xf32>
    tpu.vector_store %arg5[%c0_48, %c20_49, %c255], %107 {strides = array<i32>} : memref<2x36x256xf32, #tpu.memory_space<vmem>>, vector<1x4x1xf32>,
    %108 = vector.extract_strided_slice %8 {offsets = [0, 15], sizes = [4, 241], strides = [1, 1]} : vector<4x256xf32> to vector<4x241xf32>
    %c-1_i32_50 = arith.constant -1 : i32
    %109 = vector.broadcast %c-1_i32_50 : i32 to vector<1x256xi32>
    %110 = arith.addi %2, %109 : vector<1x256xi32>
    %c0_i32_51 = arith.constant 0 : i32
    %111 = vector.broadcast %c0_i32_51 : i32 to vector<1x256xi32>
    %112 = arith.cmpi sge, %110, %111 : vector<1x256xi32>
    %c-1_i32_52 = arith.constant -1 : i32
    %113 = vector.broadcast %c-1_i32_52 : i32 to vector<1x256xi32>
    %114 = arith.addi %2, %113 : vector<1x256xi32>
    %c16_i32_53 = arith.constant 16 : i32
    %115 = vector.broadcast %c16_i32_53 : i32 to vector<1x256xi32>
    %116 = arith.cmpi slt, %114, %115 : vector<1x256xi32>
    %117 = arith.andi %112, %116 : vector<1x256xi1>
    %118 = vector.extract_strided_slice %117 {offsets = [0, 0], sizes = [1, 241], strides = [1, 1]} : vector<1x256xi1> to vector<1x241xi1>
    %cst_54 = arith.constant 0.000000e+00 : f32
    %119 = vector.shape_cast %118 : vector<1x241xi1> to vector<1x241xi1>
    %120 = vector.broadcast %119 : vector<1x241xi1> to vector<4x241xi1>
    %121 = vector.broadcast %cst_54 : f32 to vector<4x241xf32>
    %122 = arith.select %120, %108, %121 : vector<4x241xi1>, vector<4x241xf32>
    %c0_55 = arith.constant 0 : index
    %c24 = arith.constant 24 : index
    %c0_56 = arith.constant 0 : index
    %123 = vector.load %arg5[%c0_55, %c24, %c0_56] : memref<2x36x256xf32, #tpu.memory_space<vmem>>, vector<1x4x241xf32>
    %124 = vector.shape_cast %123 : vector<1x4x241xf32> to vector<4x241xf32>
    %125 = vector.shape_cast %122 : vector<4x241xf32> to vector<1x4x241xf32>
    tpu.vector_store %arg5[%c0_55, %c24, %c0_56], %125 {strides = array<i32>} : memref<2x36x256xf32, #tpu.memory_space<vmem>>, vector<1x4x241xf32>,
    %cst_57 = arith.constant 0.000000e+00 : f32
    %126 = vector.broadcast %cst_57 : f32 to vector<4x15xf32>
    %c0_58 = arith.constant 0 : index
    %c24_59 = arith.constant 24 : index
    %c241 = arith.constant 241 : index
    %127 = vector.load %arg5[%c0_58, %c24_59, %c241] : memref<2x36x256xf32, #tpu.memory_space<vmem>>, vector<1x4x15xf32>
    %128 = vector.shape_cast %127 : vector<1x4x15xf32> to vector<4x15xf32>
    %129 = vector.shape_cast %126 : vector<4x15xf32> to vector<1x4x15xf32>
    tpu.vector_store %arg5[%c0_58, %c24_59, %c241], %129 {strides = array<i32>} : memref<2x36x256xf32, #tpu.memory_space<vmem>>, vector<1x4x15xf32>,
    %130 = vector.extract_strided_slice %8 {offsets = [0, 16], sizes = [4, 240], strides = [1, 1]} : vector<4x256xf32> to vector<4x240xf32>
    %c0_60 = arith.constant 0 : index
    %c28 = arith.constant 28 : index
    %c0_61 = arith.constant 0 : index
    %131 = vector.load %arg5[%c0_60, %c28, %c0_61] : memref<2x36x256xf32, #tpu.memory_space<vmem>>, vector<1x4x240xf32>
    %132 = vector.shape_cast %131 : vector<1x4x240xf32> to vector<4x240xf32>
    %133 = vector.shape_cast %130 : vector<4x240xf32> to vector<1x4x240xf32>
    tpu.vector_store %arg5[%c0_60, %c28, %c0_61], %133 {strides = array<i32>} : memref<2x36x256xf32, #tpu.memory_space<vmem>>, vector<1x4x240xf32>,
    %cst_62 = arith.constant 0.000000e+00 : f32
    %134 = vector.broadcast %cst_62 : f32 to vector<4x16xf32>
    %c0_63 = arith.constant 0 : index
    %c28_64 = arith.constant 28 : index
    %c240 = arith.constant 240 : index
    %135 = vector.load %arg5[%c0_63, %c28_64, %c240] : memref<2x36x256xf32, #tpu.memory_space<vmem>>, vector<1x4x16xf32>
    %136 = vector.shape_cast %135 : vector<1x4x16xf32> to vector<4x16xf32>
    %137 = vector.shape_cast %134 : vector<4x16xf32> to vector<1x4x16xf32>
    tpu.vector_store %arg5[%c0_63, %c28_64, %c240], %137 {strides = array<i32>} : memref<2x36x256xf32, #tpu.memory_space<vmem>>, vector<1x4x16xf32>,
    %138 = vector.extract_strided_slice %8 {offsets = [0, 17], sizes = [4, 239], strides = [1, 1]} : vector<4x256xf32> to vector<4x239xf32>
    %c1_i32_65 = arith.constant 1 : i32
    %139 = vector.broadcast %c1_i32_65 : i32 to vector<1x256xi32>
    %140 = arith.addi %2, %139 : vector<1x256xi32>
    %c0_i32_66 = arith.constant 0 : i32
    %141 = vector.broadcast %c0_i32_66 : i32 to vector<1x256xi32>
    %142 = arith.cmpi sge, %140, %141 : vector<1x256xi32>
    %c1_i32_67 = arith.constant 1 : i32
    %143 = vector.broadcast %c1_i32_67 : i32 to vector<1x256xi32>
    %144 = arith.addi %2, %143 : vector<1x256xi32>
    %c16_i32_68 = arith.constant 16 : i32
    %145 = vector.broadcast %c16_i32_68 : i32 to vector<1x256xi32>
    %146 = arith.cmpi slt, %144, %145 : vector<1x256xi32>
    %147 = arith.andi %142, %146 : vector<1x256xi1>
    %148 = vector.extract_strided_slice %147 {offsets = [0, 0], sizes = [1, 239], strides = [1, 1]} : vector<1x256xi1> to vector<1x239xi1>
    %cst_69 = arith.constant 0.000000e+00 : f32
    %149 = vector.shape_cast %148 : vector<1x239xi1> to vector<1x239xi1>
    %150 = vector.broadcast %149 : vector<1x239xi1> to vector<4x239xi1>
    %151 = vector.broadcast %cst_69 : f32 to vector<4x239xf32>
    %152 = arith.select %150, %138, %151 : vector<4x239xi1>, vector<4x239xf32>
    %c0_70 = arith.constant 0 : index
    %c32 = arith.constant 32 : index
    %c0_71 = arith.constant 0 : index
    %153 = vector.load %arg5[%c0_70, %c32, %c0_71] : memref<2x36x256xf32, #tpu.memory_space<vmem>>, vector<1x4x239xf32>
    %154 = vector.shape_cast %153 : vector<1x4x239xf32> to vector<4x239xf32>
    %155 = vector.shape_cast %152 : vector<4x239xf32> to vector<1x4x239xf32>
    tpu.vector_store %arg5[%c0_70, %c32, %c0_71], %155 {strides = array<i32>} : memref<2x36x256xf32, #tpu.memory_space<vmem>>, vector<1x4x239xf32>,
    %cst_72 = arith.constant 0.000000e+00 : f32
    %156 = vector.broadcast %cst_72 : f32 to vector<4x17xf32>
    %c0_73 = arith.constant 0 : index
    %c32_74 = arith.constant 32 : index
    %c239 = arith.constant 239 : index
    %157 = vector.load %arg5[%c0_73, %c32_74, %c239] : memref<2x36x256xf32, #tpu.memory_space<vmem>>, vector<1x4x17xf32>
    %158 = vector.shape_cast %157 : vector<1x4x17xf32> to vector<4x17xf32>
    %159 = vector.shape_cast %156 : vector<4x17xf32> to vector<1x4x17xf32>
    tpu.vector_store %arg5[%c0_73, %c32_74, %c239], %159 {strides = array<i32>} : memref<2x36x256xf32, #tpu.memory_space<vmem>>, vector<1x4x17xf32>,
    %c0_75 = arith.constant 0 : index
    %c0_76 = arith.constant 0 : index
    %c0_77 = arith.constant 0 : index
    %160 = vector.load %arg5[%c0_75, %c0_76, %c0_77] : memref<2x36x256xf32, #tpu.memory_space<vmem>>, vector<1x36x256xf32>
    %161 = vector.shape_cast %160 : vector<1x36x256xf32> to vector<36x256xf32>
    %cst_78 = arith.constant dense<0.000000e+00> : vector<8x256xf32>
    %162 = tpu.matmul %3, %161, %cst_78 {dimension_numbers = #tpu.dot_dimension_numbers<[1], [0], [0], [1], [0, 0, 1, 1], [], []>} : vector<8x36xf32>, vector<36x256xf32>, vector<8x256xf32> -> vector<8x256xf32>
    %163 = arith.addf %162, %6 : vector<8x256xf32>
    %cst_79 = arith.constant 0.000000e+00 : f32
    %164 = vector.broadcast %cst_79 : f32 to vector<8x256xf32>
    %165 = arith.maximumf %163, %164 : vector<8x256xf32>
    %c0_80 = arith.constant 0 : index
    %c0_81 = arith.constant 0 : index
    %c0_82 = arith.constant 0 : index
    %166 = vector.load %arg4[%c0_80, %c0_81, %c0_82] : memref<2x8x256xf32, #tpu.memory_space<vmem>>, vector<1x8x256xf32>
    %167 = vector.shape_cast %166 : vector<1x8x256xf32> to vector<8x256xf32>
    %168 = vector.shape_cast %165 : vector<8x256xf32> to vector<1x8x256xf32>
    tpu.vector_store %arg4[%c0_80, %c0_81, %c0_82], %168 {strides = array<i32>} : memref<2x8x256xf32, #tpu.memory_space<vmem>>, vector<1x8x256xf32>,
    %c1_83 = arith.constant 1 : index
    %c0_84 = arith.constant 0 : index
    %c0_85 = arith.constant 0 : index
    %169 = vector.load %arg1[%c1_83, %c0_84, %c0_85] : memref<2x4x256xf32, #tpu.memory_space<vmem>>, vector<1x4x256xf32>
    %170 = vector.shape_cast %169 : vector<1x4x256xf32> to vector<4x256xf32>
    %171 = vector.extract_strided_slice %170 {offsets = [0, 0], sizes = [4, 239], strides = [1, 1]} : vector<4x256xf32> to vector<4x239xf32>
    %c-1_i32_86 = arith.constant -1 : i32
    %172 = vector.broadcast %c-1_i32_86 : i32 to vector<1x256xi32>
    %173 = arith.addi %2, %172 : vector<1x256xi32>
    %c0_i32_87 = arith.constant 0 : i32
    %174 = vector.broadcast %c0_i32_87 : i32 to vector<1x256xi32>
    %175 = arith.cmpi sge, %173, %174 : vector<1x256xi32>
    %c-1_i32_88 = arith.constant -1 : i32
    %176 = vector.broadcast %c-1_i32_88 : i32 to vector<1x256xi32>
    %177 = arith.addi %2, %176 : vector<1x256xi32>
    %c16_i32_89 = arith.constant 16 : i32
    %178 = vector.broadcast %c16_i32_89 : i32 to vector<1x256xi32>
    %179 = arith.cmpi slt, %177, %178 : vector<1x256xi32>
    %180 = arith.andi %175, %179 : vector<1x256xi1>
    %181 = vector.extract_strided_slice %180 {offsets = [0, 17], sizes = [1, 239], strides = [1, 1]} : vector<1x256xi1> to vector<1x239xi1>
    %cst_90 = arith.constant 0.000000e+00 : f32
    %182 = vector.shape_cast %181 : vector<1x239xi1> to vector<1x239xi1>
    %183 = vector.broadcast %182 : vector<1x239xi1> to vector<4x239xi1>
    %184 = vector.broadcast %cst_90 : f32 to vector<4x239xf32>
    %185 = arith.select %183, %171, %184 : vector<4x239xi1>, vector<4x239xf32>
    %c1_91 = arith.constant 1 : index
    %c0_92 = arith.constant 0 : index
    %c17_93 = arith.constant 17 : index
    %186 = vector.load %arg5[%c1_91, %c0_92, %c17_93] : memref<2x36x256xf32, #tpu.memory_space<vmem>>, vector<1x4x239xf32>
    %187 = vector.shape_cast %186 : vector<1x4x239xf32> to vector<4x239xf32>
    %188 = vector.shape_cast %185 : vector<4x239xf32> to vector<1x4x239xf32>
    tpu.vector_store %arg5[%c1_91, %c0_92, %c17_93], %188 {strides = array<i32>} : memref<2x36x256xf32, #tpu.memory_space<vmem>>, vector<1x4x239xf32>,
    %cst_94 = arith.constant 0.000000e+00 : f32
    %189 = vector.broadcast %cst_94 : f32 to vector<4x17xf32>
    %c1_95 = arith.constant 1 : index
    %c0_96 = arith.constant 0 : index
    %c0_97 = arith.constant 0 : index
    %190 = vector.load %arg5[%c1_95, %c0_96, %c0_97] : memref<2x36x256xf32, #tpu.memory_space<vmem>>, vector<1x4x17xf32>
    %191 = vector.shape_cast %190 : vector<1x4x17xf32> to vector<4x17xf32>
    %192 = vector.shape_cast %189 : vector<4x17xf32> to vector<1x4x17xf32>
    tpu.vector_store %arg5[%c1_95, %c0_96, %c0_97], %192 {strides = array<i32>} : memref<2x36x256xf32, #tpu.memory_space<vmem>>, vector<1x4x17xf32>,
    %193 = vector.extract_strided_slice %170 {offsets = [0, 0], sizes = [4, 240], strides = [1, 1]} : vector<4x256xf32> to vector<4x240xf32>
    %c1_98 = arith.constant 1 : index
    %c4_99 = arith.constant 4 : index
    %c16_100 = arith.constant 16 : index
    %194 = vector.load %arg5[%c1_98, %c4_99, %c16_100] : memref<2x36x256xf32, #tpu.memory_space<vmem>>, vector<1x4x240xf32>
    %195 = vector.shape_cast %194 : vector<1x4x240xf32> to vector<4x240xf32>
    %196 = vector.shape_cast %193 : vector<4x240xf32> to vector<1x4x240xf32>
    tpu.vector_store %arg5[%c1_98, %c4_99, %c16_100], %196 {strides = array<i32>} : memref<2x36x256xf32, #tpu.memory_space<vmem>>, vector<1x4x240xf32>,
    %cst_101 = arith.constant 0.000000e+00 : f32
    %197 = vector.broadcast %cst_101 : f32 to vector<4x16xf32>
    %c1_102 = arith.constant 1 : index
    %c4_103 = arith.constant 4 : index
    %c0_104 = arith.constant 0 : index
    %198 = vector.load %arg5[%c1_102, %c4_103, %c0_104] : memref<2x36x256xf32, #tpu.memory_space<vmem>>, vector<1x4x16xf32>
    %199 = vector.shape_cast %198 : vector<1x4x16xf32> to vector<4x16xf32>
    %200 = vector.shape_cast %197 : vector<4x16xf32> to vector<1x4x16xf32>
    tpu.vector_store %arg5[%c1_102, %c4_103, %c0_104], %200 {strides = array<i32>} : memref<2x36x256xf32, #tpu.memory_space<vmem>>, vector<1x4x16xf32>,
    %201 = vector.extract_strided_slice %170 {offsets = [0, 0], sizes = [4, 241], strides = [1, 1]} : vector<4x256xf32> to vector<4x241xf32>
    %c1_i32_105 = arith.constant 1 : i32
    %202 = vector.broadcast %c1_i32_105 : i32 to vector<1x256xi32>
    %203 = arith.addi %2, %202 : vector<1x256xi32>
    %c0_i32_106 = arith.constant 0 : i32
    %204 = vector.broadcast %c0_i32_106 : i32 to vector<1x256xi32>
    %205 = arith.cmpi sge, %203, %204 : vector<1x256xi32>
    %c1_i32_107 = arith.constant 1 : i32
    %206 = vector.broadcast %c1_i32_107 : i32 to vector<1x256xi32>
    %207 = arith.addi %2, %206 : vector<1x256xi32>
    %c16_i32_108 = arith.constant 16 : i32
    %208 = vector.broadcast %c16_i32_108 : i32 to vector<1x256xi32>
    %209 = arith.cmpi slt, %207, %208 : vector<1x256xi32>
    %210 = arith.andi %205, %209 : vector<1x256xi1>
    %211 = vector.extract_strided_slice %210 {offsets = [0, 15], sizes = [1, 241], strides = [1, 1]} : vector<1x256xi1> to vector<1x241xi1>
    %cst_109 = arith.constant 0.000000e+00 : f32
    %212 = vector.shape_cast %211 : vector<1x241xi1> to vector<1x241xi1>
    %213 = vector.broadcast %212 : vector<1x241xi1> to vector<4x241xi1>
    %214 = vector.broadcast %cst_109 : f32 to vector<4x241xf32>
    %215 = arith.select %213, %201, %214 : vector<4x241xi1>, vector<4x241xf32>
    %c1_110 = arith.constant 1 : index
    %c8_111 = arith.constant 8 : index
    %c15_112 = arith.constant 15 : index
    %216 = vector.load %arg5[%c1_110, %c8_111, %c15_112] : memref<2x36x256xf32, #tpu.memory_space<vmem>>, vector<1x4x241xf32>
    %217 = vector.shape_cast %216 : vector<1x4x241xf32> to vector<4x241xf32>
    %218 = vector.shape_cast %215 : vector<4x241xf32> to vector<1x4x241xf32>
    tpu.vector_store %arg5[%c1_110, %c8_111, %c15_112], %218 {strides = array<i32>} : memref<2x36x256xf32, #tpu.memory_space<vmem>>, vector<1x4x241xf32>,
    %cst_113 = arith.constant 0.000000e+00 : f32
    %219 = vector.broadcast %cst_113 : f32 to vector<4x15xf32>
    %c1_114 = arith.constant 1 : index
    %c8_115 = arith.constant 8 : index
    %c0_116 = arith.constant 0 : index
    %220 = vector.load %arg5[%c1_114, %c8_115, %c0_116] : memref<2x36x256xf32, #tpu.memory_space<vmem>>, vector<1x4x15xf32>
    %221 = vector.shape_cast %220 : vector<1x4x15xf32> to vector<4x15xf32>
    %222 = vector.shape_cast %219 : vector<4x15xf32> to vector<1x4x15xf32>
    tpu.vector_store %arg5[%c1_114, %c8_115, %c0_116], %222 {strides = array<i32>} : memref<2x36x256xf32, #tpu.memory_space<vmem>>, vector<1x4x15xf32>,
    %223 = vector.extract_strided_slice %170 {offsets = [0, 0], sizes = [4, 255], strides = [1, 1]} : vector<4x256xf32> to vector<4x255xf32>
    %c-1_i32_117 = arith.constant -1 : i32
    %224 = vector.broadcast %c-1_i32_117 : i32 to vector<1x256xi32>
    %225 = arith.addi %2, %224 : vector<1x256xi32>
    %c0_i32_118 = arith.constant 0 : i32
    %226 = vector.broadcast %c0_i32_118 : i32 to vector<1x256xi32>
    %227 = arith.cmpi sge, %225, %226 : vector<1x256xi32>
    %c-1_i32_119 = arith.constant -1 : i32
    %228 = vector.broadcast %c-1_i32_119 : i32 to vector<1x256xi32>
    %229 = arith.addi %2, %228 : vector<1x256xi32>
    %c16_i32_120 = arith.constant 16 : i32
    %230 = vector.broadcast %c16_i32_120 : i32 to vector<1x256xi32>
    %231 = arith.cmpi slt, %229, %230 : vector<1x256xi32>
    %232 = arith.andi %227, %231 : vector<1x256xi1>
    %233 = vector.extract_strided_slice %232 {offsets = [0, 1], sizes = [1, 255], strides = [1, 1]} : vector<1x256xi1> to vector<1x255xi1>
    %cst_121 = arith.constant 0.000000e+00 : f32
    %234 = vector.shape_cast %233 : vector<1x255xi1> to vector<1x255xi1>
    %235 = vector.broadcast %234 : vector<1x255xi1> to vector<4x255xi1>
    %236 = vector.broadcast %cst_121 : f32 to vector<4x255xf32>
    %237 = arith.select %235, %223, %236 : vector<4x255xi1>, vector<4x255xf32>
    %c1_122 = arith.constant 1 : index
    %c12_123 = arith.constant 12 : index
    %c1_124 = arith.constant 1 : index
    %238 = vector.load %arg5[%c1_122, %c12_123, %c1_124] : memref<2x36x256xf32, #tpu.memory_space<vmem>>, vector<1x4x255xf32>
    %239 = vector.shape_cast %238 : vector<1x4x255xf32> to vector<4x255xf32>
    %240 = vector.shape_cast %237 : vector<4x255xf32> to vector<1x4x255xf32>
    tpu.vector_store %arg5[%c1_122, %c12_123, %c1_124], %240 {strides = array<i32>} : memref<2x36x256xf32, #tpu.memory_space<vmem>>, vector<1x4x255xf32>,
    %cst_125 = arith.constant 0.000000e+00 : f32
    %241 = vector.broadcast %cst_125 : f32 to vector<4x1xf32>
    %c1_126 = arith.constant 1 : index
    %c12_127 = arith.constant 12 : index
    %c0_128 = arith.constant 0 : index
    %242 = vector.load %arg5[%c1_126, %c12_127, %c0_128] : memref<2x36x256xf32, #tpu.memory_space<vmem>>, vector<1x4x1xf32>
    %243 = vector.shape_cast %242 : vector<1x4x1xf32> to vector<4x1xf32>
    %244 = vector.shape_cast %241 : vector<4x1xf32> to vector<1x4x1xf32>
    tpu.vector_store %arg5[%c1_126, %c12_127, %c0_128], %244 {strides = array<i32>} : memref<2x36x256xf32, #tpu.memory_space<vmem>>, vector<1x4x1xf32>,
    %c1_129 = arith.constant 1 : index
    %c16_130 = arith.constant 16 : index
    %c0_131 = arith.constant 0 : index
    %245 = vector.load %arg5[%c1_129, %c16_130, %c0_131] : memref<2x36x256xf32, #tpu.memory_space<vmem>>, vector<1x4x256xf32>
    %246 = vector.shape_cast %245 : vector<1x4x256xf32> to vector<4x256xf32>
    %247 = vector.shape_cast %170 : vector<4x256xf32> to vector<1x4x256xf32>
    tpu.vector_store %arg5[%c1_129, %c16_130, %c0_131], %247 {strides = array<i32>} : memref<2x36x256xf32, #tpu.memory_space<vmem>>, vector<1x4x256xf32>,
    %248 = vector.extract_strided_slice %170 {offsets = [0, 1], sizes = [4, 255], strides = [1, 1]} : vector<4x256xf32> to vector<4x255xf32>
    %c1_i32_132 = arith.constant 1 : i32
    %249 = vector.broadcast %c1_i32_132 : i32 to vector<1x256xi32>
    %250 = arith.addi %2, %249 : vector<1x256xi32>
    %c0_i32_133 = arith.constant 0 : i32
    %251 = vector.broadcast %c0_i32_133 : i32 to vector<1x256xi32>
    %252 = arith.cmpi sge, %250, %251 : vector<1x256xi32>
    %c1_i32_134 = arith.constant 1 : i32
    %253 = vector.broadcast %c1_i32_134 : i32 to vector<1x256xi32>
    %254 = arith.addi %2, %253 : vector<1x256xi32>
    %c16_i32_135 = arith.constant 16 : i32
    %255 = vector.broadcast %c16_i32_135 : i32 to vector<1x256xi32>
    %256 = arith.cmpi slt, %254, %255 : vector<1x256xi32>
    %257 = arith.andi %252, %256 : vector<1x256xi1>
    %258 = vector.extract_strided_slice %257 {offsets = [0, 0], sizes = [1, 255], strides = [1, 1]} : vector<1x256xi1> to vector<1x255xi1>
    %cst_136 = arith.constant 0.000000e+00 : f32
    %259 = vector.shape_cast %258 : vector<1x255xi1> to vector<1x255xi1>
    %260 = vector.broadcast %259 : vector<1x255xi1> to vector<4x255xi1>
    %261 = vector.broadcast %cst_136 : f32 to vector<4x255xf32>
    %262 = arith.select %260, %248, %261 : vector<4x255xi1>, vector<4x255xf32>
    %c1_137 = arith.constant 1 : index
    %c20_138 = arith.constant 20 : index
    %c0_139 = arith.constant 0 : index
    %263 = vector.load %arg5[%c1_137, %c20_138, %c0_139] : memref<2x36x256xf32, #tpu.memory_space<vmem>>, vector<1x4x255xf32>
    %264 = vector.shape_cast %263 : vector<1x4x255xf32> to vector<4x255xf32>
    %265 = vector.shape_cast %262 : vector<4x255xf32> to vector<1x4x255xf32>
    tpu.vector_store %arg5[%c1_137, %c20_138, %c0_139], %265 {strides = array<i32>} : memref<2x36x256xf32, #tpu.memory_space<vmem>>, vector<1x4x255xf32>,
    %cst_140 = arith.constant 0.000000e+00 : f32
    %266 = vector.broadcast %cst_140 : f32 to vector<4x1xf32>
    %c1_141 = arith.constant 1 : index
    %c20_142 = arith.constant 20 : index
    %c255_143 = arith.constant 255 : index
    %267 = vector.load %arg5[%c1_141, %c20_142, %c255_143] : memref<2x36x256xf32, #tpu.memory_space<vmem>>, vector<1x4x1xf32>
    %268 = vector.shape_cast %267 : vector<1x4x1xf32> to vector<4x1xf32>
    %269 = vector.shape_cast %266 : vector<4x1xf32> to vector<1x4x1xf32>
    tpu.vector_store %arg5[%c1_141, %c20_142, %c255_143], %269 {strides = array<i32>} : memref<2x36x256xf32, #tpu.memory_space<vmem>>, vector<1x4x1xf32>,
    %270 = vector.extract_strided_slice %170 {offsets = [0, 15], sizes = [4, 241], strides = [1, 1]} : vector<4x256xf32> to vector<4x241xf32>
    %c-1_i32_144 = arith.constant -1 : i32
    %271 = vector.broadcast %c-1_i32_144 : i32 to vector<1x256xi32>
    %272 = arith.addi %2, %271 : vector<1x256xi32>
    %c0_i32_145 = arith.constant 0 : i32
    %273 = vector.broadcast %c0_i32_145 : i32 to vector<1x256xi32>
    %274 = arith.cmpi sge, %272, %273 : vector<1x256xi32>
    %c-1_i32_146 = arith.constant -1 : i32
    %275 = vector.broadcast %c-1_i32_146 : i32 to vector<1x256xi32>
    %276 = arith.addi %2, %275 : vector<1x256xi32>
    %c16_i32_147 = arith.constant 16 : i32
    %277 = vector.broadcast %c16_i32_147 : i32 to vector<1x256xi32>
    %278 = arith.cmpi slt, %276, %277 : vector<1x256xi32>
    %279 = arith.andi %274, %278 : vector<1x256xi1>
    %280 = vector.extract_strided_slice %279 {offsets = [0, 0], sizes = [1, 241], strides = [1, 1]} : vector<1x256xi1> to vector<1x241xi1>
    %cst_148 = arith.constant 0.000000e+00 : f32
    %281 = vector.shape_cast %280 : vector<1x241xi1> to vector<1x241xi1>
    %282 = vector.broadcast %281 : vector<1x241xi1> to vector<4x241xi1>
    %283 = vector.broadcast %cst_148 : f32 to vector<4x241xf32>
    %284 = arith.select %282, %270, %283 : vector<4x241xi1>, vector<4x241xf32>
    %c1_149 = arith.constant 1 : index
    %c24_150 = arith.constant 24 : index
    %c0_151 = arith.constant 0 : index
    %285 = vector.load %arg5[%c1_149, %c24_150, %c0_151] : memref<2x36x256xf32, #tpu.memory_space<vmem>>, vector<1x4x241xf32>
    %286 = vector.shape_cast %285 : vector<1x4x241xf32> to vector<4x241xf32>
    %287 = vector.shape_cast %284 : vector<4x241xf32> to vector<1x4x241xf32>
    tpu.vector_store %arg5[%c1_149, %c24_150, %c0_151], %287 {strides = array<i32>} : memref<2x36x256xf32, #tpu.memory_space<vmem>>, vector<1x4x241xf32>,
    %cst_152 = arith.constant 0.000000e+00 : f32
    %288 = vector.broadcast %cst_152 : f32 to vector<4x15xf32>
    %c1_153 = arith.constant 1 : index
    %c24_154 = arith.constant 24 : index
    %c241_155 = arith.constant 241 : index
    %289 = vector.load %arg5[%c1_153, %c24_154, %c241_155] : memref<2x36x256xf32, #tpu.memory_space<vmem>>, vector<1x4x15xf32>
    %290 = vector.shape_cast %289 : vector<1x4x15xf32> to vector<4x15xf32>
    %291 = vector.shape_cast %288 : vector<4x15xf32> to vector<1x4x15xf32>
    tpu.vector_store %arg5[%c1_153, %c24_154, %c241_155], %291 {strides = array<i32>} : memref<2x36x256xf32, #tpu.memory_space<vmem>>, vector<1x4x15xf32>,
    %292 = vector.extract_strided_slice %170 {offsets = [0, 16], sizes = [4, 240], strides = [1, 1]} : vector<4x256xf32> to vector<4x240xf32>
    %c1_156 = arith.constant 1 : index
    %c28_157 = arith.constant 28 : index
    %c0_158 = arith.constant 0 : index
    %293 = vector.load %arg5[%c1_156, %c28_157, %c0_158] : memref<2x36x256xf32, #tpu.memory_space<vmem>>, vector<1x4x240xf32>
    %294 = vector.shape_cast %293 : vector<1x4x240xf32> to vector<4x240xf32>
    %295 = vector.shape_cast %292 : vector<4x240xf32> to vector<1x4x240xf32>
    tpu.vector_store %arg5[%c1_156, %c28_157, %c0_158], %295 {strides = array<i32>} : memref<2x36x256xf32, #tpu.memory_space<vmem>>, vector<1x4x240xf32>,
    %cst_159 = arith.constant 0.000000e+00 : f32
    %296 = vector.broadcast %cst_159 : f32 to vector<4x16xf32>
    %c1_160 = arith.constant 1 : index
    %c28_161 = arith.constant 28 : index
    %c240_162 = arith.constant 240 : index
    %297 = vector.load %arg5[%c1_160, %c28_161, %c240_162] : memref<2x36x256xf32, #tpu.memory_space<vmem>>, vector<1x4x16xf32>
    %298 = vector.shape_cast %297 : vector<1x4x16xf32> to vector<4x16xf32>
    %299 = vector.shape_cast %296 : vector<4x16xf32> to vector<1x4x16xf32>
    tpu.vector_store %arg5[%c1_160, %c28_161, %c240_162], %299 {strides = array<i32>} : memref<2x36x256xf32, #tpu.memory_space<vmem>>, vector<1x4x16xf32>,
    %300 = vector.extract_strided_slice %170 {offsets = [0, 17], sizes = [4, 239], strides = [1, 1]} : vector<4x256xf32> to vector<4x239xf32>
    %c1_i32_163 = arith.constant 1 : i32
    %301 = vector.broadcast %c1_i32_163 : i32 to vector<1x256xi32>
    %302 = arith.addi %2, %301 : vector<1x256xi32>
    %c0_i32_164 = arith.constant 0 : i32
    %303 = vector.broadcast %c0_i32_164 : i32 to vector<1x256xi32>
    %304 = arith.cmpi sge, %302, %303 : vector<1x256xi32>
    %c1_i32_165 = arith.constant 1 : i32
    %305 = vector.broadcast %c1_i32_165 : i32 to vector<1x256xi32>
    %306 = arith.addi %2, %305 : vector<1x256xi32>
    %c16_i32_166 = arith.constant 16 : i32
    %307 = vector.broadcast %c16_i32_166 : i32 to vector<1x256xi32>
    %308 = arith.cmpi slt, %306, %307 : vector<1x256xi32>
    %309 = arith.andi %304, %308 : vector<1x256xi1>
    %310 = vector.extract_strided_slice %309 {offsets = [0, 0], sizes = [1, 239], strides = [1, 1]} : vector<1x256xi1> to vector<1x239xi1>
    %cst_167 = arith.constant 0.000000e+00 : f32
    %311 = vector.shape_cast %310 : vector<1x239xi1> to vector<1x239xi1>
    %312 = vector.broadcast %311 : vector<1x239xi1> to vector<4x239xi1>
    %313 = vector.broadcast %cst_167 : f32 to vector<4x239xf32>
    %314 = arith.select %312, %300, %313 : vector<4x239xi1>, vector<4x239xf32>
    %c1_168 = arith.constant 1 : index
    %c32_169 = arith.constant 32 : index
    %c0_170 = arith.constant 0 : index
    %315 = vector.load %arg5[%c1_168, %c32_169, %c0_170] : memref<2x36x256xf32, #tpu.memory_space<vmem>>, vector<1x4x239xf32>
    %316 = vector.shape_cast %315 : vector<1x4x239xf32> to vector<4x239xf32>
    %317 = vector.shape_cast %314 : vector<4x239xf32> to vector<1x4x239xf32>
    tpu.vector_store %arg5[%c1_168, %c32_169, %c0_170], %317 {strides = array<i32>} : memref<2x36x256xf32, #tpu.memory_space<vmem>>, vector<1x4x239xf32>,
    %cst_171 = arith.constant 0.000000e+00 : f32
    %318 = vector.broadcast %cst_171 : f32 to vector<4x17xf32>
    %c1_172 = arith.constant 1 : index
    %c32_173 = arith.constant 32 : index
    %c239_174 = arith.constant 239 : index
    %319 = vector.load %arg5[%c1_172, %c32_173, %c239_174] : memref<2x36x256xf32, #tpu.memory_space<vmem>>, vector<1x4x17xf32>
    %320 = vector.shape_cast %319 : vector<1x4x17xf32> to vector<4x17xf32>
    %321 = vector.shape_cast %318 : vector<4x17xf32> to vector<1x4x17xf32>
    tpu.vector_store %arg5[%c1_172, %c32_173, %c239_174], %321 {strides = array<i32>} : memref<2x36x256xf32, #tpu.memory_space<vmem>>, vector<1x4x17xf32>,
    %c1_175 = arith.constant 1 : index
    %c0_176 = arith.constant 0 : index
    %c0_177 = arith.constant 0 : index
    %322 = vector.load %arg5[%c1_175, %c0_176, %c0_177] : memref<2x36x256xf32, #tpu.memory_space<vmem>>, vector<1x36x256xf32>
    %323 = vector.shape_cast %322 : vector<1x36x256xf32> to vector<36x256xf32>
    %cst_178 = arith.constant dense<0.000000e+00> : vector<8x256xf32>
    %324 = tpu.matmul %3, %323, %cst_178 {dimension_numbers = #tpu.dot_dimension_numbers<[1], [0], [0], [1], [0, 0, 1, 1], [], []>} : vector<8x36xf32>, vector<36x256xf32>, vector<8x256xf32> -> vector<8x256xf32>
    %325 = arith.addf %324, %6 : vector<8x256xf32>
    %cst_179 = arith.constant 0.000000e+00 : f32
    %326 = vector.broadcast %cst_179 : f32 to vector<8x256xf32>
    %327 = arith.maximumf %325, %326 : vector<8x256xf32>
    %c1_180 = arith.constant 1 : index
    %c0_181 = arith.constant 0 : index
    %c0_182 = arith.constant 0 : index
    %328 = vector.load %arg4[%c1_180, %c0_181, %c0_182] : memref<2x8x256xf32, #tpu.memory_space<vmem>>, vector<1x8x256xf32>
    %329 = vector.shape_cast %328 : vector<1x8x256xf32> to vector<8x256xf32>
    %330 = vector.shape_cast %327 : vector<8x256xf32> to vector<1x8x256xf32>
    tpu.vector_store %arg4[%c1_180, %c0_181, %c0_182], %330 {strides = array<i32>} : memref<2x8x256xf32, #tpu.memory_space<vmem>>, vector<1x8x256xf32>,
    return
  }
  func.func @transform_0(%arg0: i32) -> (i32, i32, i32) {
    %c0_i32 = arith.constant 0 : i32
    %c0_i32_0 = arith.constant 0 : i32
    %c0_i32_1 = arith.constant 0 : i32
    return %arg0, %c0_i32, %c0_i32_0 : i32, i32, i32
  }
  func.func @transform_1(%arg0: i32) -> (i32, i32) {
    %c0_i32 = arith.constant 0 : i32
    %c0_i32_0 = arith.constant 0 : i32
    %c0_i32_1 = arith.constant 0 : i32
    return %c0_i32, %c0_i32_0 : i32, i32
  }
  func.func @transform_2(%arg0: i32) -> (i32, i32) {
    %c0_i32 = arith.constant 0 : i32
    %c0_i32_0 = arith.constant 0 : i32
    %c0_i32_1 = arith.constant 0 : i32
    return %c0_i32, %c0_i32_0 : i32, i32
  }
  func.func @transform_3(%arg0: i32) -> (i32, i32, i32) {
    %c0_i32 = arith.constant 0 : i32
    %c0_i32_0 = arith.constant 0 : i32
    %c0_i32_1 = arith.constant 0 : i32
    return %arg0, %c0_i32, %c0_i32_0 : i32, i32, i32
  }
}

</mosaic_0001>

<llo_original>
// kernel: decoder_module_forward.1
$region0: #{decoder_module_forward.1}
  #allocation0 [shape = 'u32[]', space=smem, size = 0x4, offset = 0x4, fixed_abs, tag = 'smem constant byte address 0x4 - core index']
  #allocation1 [shape = 'u32[144,128]{1,0:T(1,128)}', space=vmem, size = 0x12000, scoped, tag = 'internal scratch']
  #allocation2 [shape = 'f32[2,36,256]{2,1,0:T(8,128)}', space=vmem, size = 0x14000, scoped, tag = 'scratch operand']
  %s0 = inlined_call_operand.vmem [shape: f32[2,4,256], index: 0, kind: input, shape index: {}]
  %s1 = inlined_call_operand.vmem [shape: f32[8,36], index: 1, kind: input, shape index: {}]
  %s2 = inlined_call_operand.vmem [shape: f32[8,1], index: 2, kind: input, shape index: {}]
  %s3 = inlined_call_operand.vmem [shape: f32[2,8,256], index: 3, kind: output, shape index: {}]
  %s4 = sld [smem:[#allocation0]]
  $region22: #{decoder_module_forward.1} parent=0
    _
  %s6 = ssub.s32 1, %s4
  %s7 = scalar_select 0, %s6, %s4
  // Predicated region
  $region2: #{decoder_module_forward.1} parent=0 // pred_check
    _
  $region3: #{decoder_module_forward.1} parent=0 // pred_check_branch
    %9 = sbr.rel (0) target = $region5
  $region4: #{decoder_module_forward.1} parent=0 // pred_region
    _
  $region5: #{decoder_module_forward.1} parent=0 // pred_fallthru
    _
  // Predicated region
  $region6: #{decoder_module_forward.1} parent=0 // pred_check
    _
  $region7: #{decoder_module_forward.1} parent=0 // pred_check_branch
    %11 = sbr.rel (0) target = $region9
  $region8: #{decoder_module_forward.1} parent=0 // pred_region
    _
  $region9: #{decoder_module_forward.1} parent=0 // pred_fallthru
    _
  // Predicated region
  $region10: #{decoder_module_forward.1} parent=0 // pred_check
    _
  $region11: #{decoder_module_forward.1} parent=0 // pred_check_branch
    %13 = sbr.rel (0) target = $region13
  $region12: #{decoder_module_forward.1} parent=0 // pred_region
    _
  $region13: #{decoder_module_forward.1} parent=0 // pred_fallthru
    _
  %v14 = vlaneseq
  %v15 = vand.u32 %v14, 127
  %v16 = vadd.s32 %v15, 128
  %v17 = vand.u32 %v15, 15
  %v18 = vand.u32 %v16, 15
  %v19 = vld [vmem:[%s1] sm:$0xff]
  %v20 = vld [vmem:[%s2] sm:$0xff]
  %22 = vset.pattern.permute.xlu0 0
  %23 = vperm.xlu0 %22, %v20
  %v24 = vpop.permute.xlu0 %23
  %v26 = vld [vmem:[%s0] sm:$0xff]
  %v27 = vadd.s32 %v17, 4294967295
  %v28 = vadd.s32 %v18, 4294967295
  %vm29 = vcmp.ge.s32.totalorder %v27, 0
  %vm30 = vcmp.ge.s32.totalorder %v28, 0
  %vm31 = vcmp.lt.s32.totalorder %v27, 16
  %vm32 = vcmp.lt.s32.totalorder %v28, 16
  %vm33 = vmand %vm29, %vm31
  %vm34 = vmand %vm30, %vm32
  %v35 = vsel %vm33, 1, 0
  %v36 = vsel %vm34, 1, 0
  %vm37 = vcmp.eq.s32.totalorder %v35, 1
  %vm38 = vcmp.eq.s32.totalorder %v36, 1
  %v40 = vcombine.high %v26, %v26
  %41 = vrot.lane.b32.xlu0 %v26, 17
  %v42 = vpop.permute.xlu0 %41
  %43 = vrot.lane.b32.xlu0 %v40, 17
  %v44 = vpop.permute.xlu0 %43
  %vm45 = vcmask 138240
  %v46 = vsel %vm45, %v42, %v44
  %v49 = vsel %vm37, %v42, 0.0
  %v50 = vsel %vm38, %v46, 0.0
  %vm51 = vcmask 1043592
  %52 = vst.msk [vmem:[#allocation2] sm:$0xf] %vm51, %v49
  %53 = vst [vmem:[#allocation2 + $0x8] sm:$0xf] %v50
  %vm54 = vcmask 134144
  %55 = vst.msk [vmem:[#allocation2] sm:$0xf] %vm54, 0.0
  %v56 = vcombine.low %v26, %v26
  %57 = vrot.lane.b32.xlu0 %v56, 16
  %v58 = vpop.permute.xlu0 %57
  %59 = vrot.lane.b32.xlu0 %v26, 16
  %v60 = vpop.permute.xlu0 %59
  %vm61 = vcmask 130048
  %v62 = vsel %vm61, %v58, %v60
  %vm65 = vcmask 1047684
  %66 = vst.msk [vmem:[#allocation2] sm:$0xf0] %vm65, %v58
  %67 = vst [vmem:[#allocation2 + $0x8] sm:$0xf0] %v62
  %vm68 = vcmask 130052
  %69 = vst.msk [vmem:[#allocation2] sm:$0xf0] %vm68, 0.0
  %v70 = vadd.s32 %v17, 1
  %v71 = vadd.s32 %v18, 1
  %vm72 = vcmp.ge.s32.totalorder %v70, 0
  %vm73 = vcmp.ge.s32.totalorder %v71, 0
  %vm74 = vcmp.lt.s32.totalorder %v70, 16
  %vm75 = vcmp.lt.s32.totalorder %v71, 16
  %vm76 = vmand %vm72, %vm74
  %vm77 = vmand %vm73, %vm75
  %v78 = vsel %vm76, 1, 0
  %v79 = vsel %vm77, 1, 0
  %vm80 = vcmp.eq.s32.totalorder %v78, 1
  %vm81 = vcmp.eq.s32.totalorder %v79, 1
  %82 = vrot.lane.b32.xlu0 %v26, 15
  %v83 = vpop.permute.xlu0 %82
  %84 = vrot.lane.b32.xlu0 %v40, 15
  %v85 = vpop.permute.xlu0 %84
  %vm86 = vcmask 121856
  %v87 = vsel %vm86, %v83, %v85
  %v90 = vsel %vm80, %v83, 0.0
  %v91 = vsel %vm81, %v87, 0.0
  %vm92 = vcmask 1043576
  %93 = vst.msk [vmem:[#allocation2 + $0x10] sm:$0xf] %vm92, %v90
  %94 = vst [vmem:[#allocation2 + $0x18] sm:$0xf] %v91
  %vm95 = vcmask 117760
  %96 = vst.msk [vmem:[#allocation2 + $0x10] sm:$0xf] %vm95, 0.0
  %97 = vrot.lane.b32.xlu0 %v26, 1
  %v98 = vpop.permute.xlu0 %97
  %99 = vrot.lane.b32.xlu0 %v40, 1
  %v100 = vpop.permute.xlu0 %99
  %vm101 = vcmask 7168
  %v102 = vsel %vm101, %v98, %v100
  %v105 = vsel %vm37, %v98, 0.0
  %v106 = vsel %vm38, %v102, 0.0
  %v109 = vrot.slane %v105, 4
  %v110 = vrot.slane %v106, 4
  %vm113 = vcmask 1047564
  %114 = vst.msk [vmem:[#allocation2 + $0x10] sm:$0xf0] %vm113, %v109
  %115 = vst [vmem:[#allocation2 + $0x18] sm:$0xf0] %v110
  %vm116 = vcmask 7172
  %117 = vst.msk [vmem:[#allocation2 + $0x10] sm:$0xf0] %vm116, 0.0
  %119 = vst [vmem:[#allocation2 + $0x20] sm:$0xf] %v26
  %120 = vst [vmem:[#allocation2 + $0x28] sm:$0xf] %v40
  %121 = vrot.lane.b32.xlu0 %v26, 127
  %v122 = vpop.permute.xlu0 %121
  %123 = vrot.lane.b32.xlu0 %v40, 127
  %v124 = vpop.permute.xlu0 %123
  %vm125 = vcmask 1039360
  %v126 = vsel %vm125, %v122, %v124
  %v129 = vsel %vm80, %v126, 0.0
  %v130 = vsel %vm81, %v124, 0.0
  %v133 = vrot.slane %v129, 4
  %v134 = vrot.slane %v130, 4
  %137 = vst [vmem:[#allocation2 + $0x20] sm:$0xf0] %v133
  %vm138 = vcmask 1039364
  %139 = vst.msk [vmem:[#allocation2 + $0x28] sm:$0xf0] %vm138, %v134
  %vm140 = vcmask 1048572
  %141 = vst.msk [vmem:[#allocation2 + $0x28] sm:$0xf0] %vm140, 0.0
  %142 = vrot.lane.b32.xlu0 %v26, 113
  %v143 = vpop.permute.xlu0 %142
  %144 = vrot.lane.b32.xlu0 %v40, 113
  %v145 = vpop.permute.xlu0 %144
  %vm146 = vcmask 924672
  %v147 = vsel %vm146, %v143, %v145
  %v150 = vsel %vm37, %v147, 0.0
  %v151 = vsel %vm38, %v145, 0.0
  %152 = vst [vmem:[#allocation2 + $0x30] sm:$0xf] %v150
  %vm153 = vcmask 920576
  %154 = vst.msk [vmem:[#allocation2 + $0x38] sm:$0xf] %vm153, %v151
  %vm155 = vcmask 1044360
  %156 = vst.msk [vmem:[#allocation2 + $0x38] sm:$0xf] %vm155, 0.0
  %157 = vrot.lane.b32.xlu0 %v56, 112
  %v158 = vpop.permute.xlu0 %157
  %159 = vrot.lane.b32.xlu0 %v26, 112
  %v160 = vpop.permute.xlu0 %159
  %vm161 = vcmask 916480
  %v162 = vsel %vm161, %v158, %v160
  %165 = vst [vmem:[#allocation2 + $0x30] sm:$0xf0] %v162
  %vm166 = vcmask 916484
  %167 = vst.msk [vmem:[#allocation2 + $0x38] sm:$0xf0] %vm166, %v160
  %vm168 = vcmask 1048452
  %169 = vst.msk [vmem:[#allocation2 + $0x38] sm:$0xf0] %vm168, 0.0
  %170 = vrot.lane.b32.xlu0 %v26, 111
  %v171 = vpop.permute.xlu0 %170
  %172 = vrot.lane.b32.xlu0 %v40, 111
  %v173 = vpop.permute.xlu0 %172
  %vm174 = vcmask 908288
  %v175 = vsel %vm174, %v171, %v173
  %v178 = vsel %vm80, %v175, 0.0
  %v179 = vsel %vm81, %v173, 0.0
  %180 = vst [vmem:[#allocation2 + $0x40] sm:$0xf] %v178
  %vm181 = vcmask 904192
  %182 = vst.msk [vmem:[#allocation2 + $0x48] sm:$0xf] %vm181, %v179
  %vm183 = vcmask 1044344
  %184 = vst.msk [vmem:[#allocation2 + $0x48] sm:$0xf] %vm183, 0.0
  %v185 = vld [vmem:[#allocation2] sm:$0xff]
  %v186 = vld [vmem:[#allocation2 + $0x8] sm:$0xff]
  %v187 = vld [vmem:[#allocation2 + $0x10] sm:$0xff]
  %v188 = vld [vmem:[#allocation2 + $0x18] sm:$0xff]
  %v189 = vld [vmem:[#allocation2 + $0x20] sm:$0xff]
  %v190 = vld [vmem:[#allocation2 + $0x28] sm:$0xff]
  %v191 = vld [vmem:[#allocation2 + $0x30] sm:$0xff]
  %v192 = vld [vmem:[#allocation2 + $0x38] sm:$0xff]
  %v193 = vld [vmem:[#allocation2 + $0x40] sm:$0xf]
  %v194 = vld [vmem:[#allocation2 + $0x48] sm:$0xf]
  %vm195 = vcmask 293888
  %v197 = vsel %vm195, %v19, 0
  %vm199 = vcmask 1043456
  %v201 = vsel %vm199, %v193, 0
  %v204 = vsel %vm199, %v194, 0
  %206 = vmatprep.subr.mxu0 %v186
  %207 = vmatpush1.msra.mxu0 %v185
  %208 = vmatprep.subr.mxu0 %v188
  %209 = vmatpush1.msra.mxu0 %v187
  %210 = vmatprep.subr.mxu0 %v190
  %211 = vmatpush1.msra.mxu0 %v189
  %212 = vmatprep.subr.mxu0 %v192
  %213 = vmatpush1.msra.mxu0 %v191
  %214 = vmatprep.subr.mxu0 %v204
  %215 = vmatpush1.msra.mxu0 %v201
  %216 = vmatprep.subr.mxu0 0.0
  %217 = vmatpush1.msra.mxu0 0.0
  %218 = vmatprep.subr.mxu0 0.0
  %219 = vmatpush1.msra.mxu0 0.0
  %220 = vmatprep.subr.mxu0 0.0
  %221 = vmatpush1.msra.mxu0 0.0
  %222 = vmatprep.subr.mxu0 0.0
  %223 = vmatpush1.msra.mxu0 0.0
  %224 = vmatprep.subr.mxu0 0.0
  %225 = vmatpush1.msra.mxu0 0.0
  %226 = vmatprep.subr.mxu0 0.0
  %227 = vmatpush1.msra.mxu0 0.0
  %228 = vmatprep.subr.mxu0 0.0
  %229 = vmatpush1.msra.mxu0 0.0
  %230 = vmatprep.subr.mxu0 0.0
  %231 = vmatpush1.msra.mxu0 0.0
  %232 = vmatprep.subr.mxu0 0.0
  %233 = vmatpush1.msra.mxu0 0.0
  %234 = vmatprep.subr.mxu0 0.0
  %235 = vmatpush1.msra.mxu0 0.0
  %236 = vmatprep.subr.mxu0 0.0
  %237 = vmatpush1.msra.mxu0 0.0
  %238 = vmatprep.subr.mxu0 0.0
  %239 = vmatpush1.msra.mxu0 0.0
  %240 = vmatprep.subr.mxu0 0.0
  %241 = vmatpush1.msra.mxu0 0.0
  %242 = vmatprep.subr.mxu0 0.0
  %243 = vmatpush1.msra.mxu0 0.0
  %244 = vmatprep.subr.mxu0 0.0
  %245 = vmatpush1.msra.mxu0 0.0
  %246 = vmatprep.subr.mxu0 0.0
  %247 = vmatpush1.msra.mxu0 0.0
  %248 = vmatprep.subr.mxu0 0.0
  %249 = vmatpush1.msra.mxu0 0.0
  %250 = vmatprep.subr.mxu0 0.0
  %251 = vmatpush1.msra.mxu0 0.0
  %252 = vmatprep.subr.mxu0 0.0
  %253 = vmatpush1.msra.mxu0 0.0
  %254 = vmatprep.subr.mxu0 0.0
  %255 = vmatpush1.msra.mxu0 0.0
  %256 = vmatprep.subr.mxu0 0.0
  %257 = vmatpush1.msra.mxu0 0.0
  %258 = vmatprep.subr.mxu0 0.0
  %259 = vmatpush1.msra.mxu0 0.0
  %260 = vmatprep.subr.mxu0 0.0
  %261 = vmatpush1.msra.mxu0 0.0
  %262 = vmatprep.subr.mxu0 0.0
  %263 = vmatpush1.msra.mxu0 0.0
  %264 = vmatprep.subr.mxu0 0.0
  %265 = vmatpush1.msra.mxu0 0.0
  %266 = vmatprep.subr.mxu0 0.0
  %267 = vmatpush1.msra.mxu0 0.0
  %268 = vmatprep.subr.mxu0 0.0
  %269 = vmatpush1.msra.mxu0 0.0
  %270 = vmatprep.mubr.f32.mxu0 0.0
  %271 = vmatmul.mubr.f32.gmra.mrb[0].mxu0 %v197
  %v272 = vpop.f32.mrb[0].mxu0
  %v273 = vadd.f32 %v24, %v272
  %v274 = vpop.f32.mrb[0].mxu0
  %v275 = vadd.f32 %v24, %v274
  %276 = vdwg.mxu0
  %v277 = vmax.f32 %v273, 0.0
  %v278 = vmax.f32 %v275, 0.0
  %279 = vst [vmem:[%s3] sm:$0xff] %v277
  %280 = vst [vmem:[%s3 + $0x8] sm:$0xff] %v278
  %s281 = scalar_lea.vmem %s0, 8
  %v282 = vld [vmem:[%s281] sm:$0xff]
  %v284 = vcombine.high %v282, %v282
  %285 = vrot.lane.b32.xlu0 %v282, 17
  %v286 = vpop.permute.xlu0 %285
  %287 = vrot.lane.b32.xlu0 %v284, 17
  %v288 = vpop.permute.xlu0 %287
  %v289 = vsel %vm45, %v286, %v288
  %v292 = vsel %vm37, %v286, 0.0
  %v293 = vsel %vm38, %v289, 0.0
  %s294 = scalar_lea.vmem [#allocation2], 80
  %295 = vst.msk [vmem:[%s294] sm:$0xf] %vm51, %v292
  %296 = vst [vmem:[%s294 + $0x8] sm:$0xf] %v293
  %297 = vst.msk [vmem:[%s294] sm:$0xf] %vm54, 0.0
  %v298 = vcombine.low %v282, %v282
  %299 = vrot.lane.b32.xlu0 %v298, 16
  %v300 = vpop.permute.xlu0 %299
  %301 = vrot.lane.b32.xlu0 %v282, 16
  %v302 = vpop.permute.xlu0 %301
  %v303 = vsel %vm61, %v300, %v302
  %306 = vst.msk [vmem:[%s294] sm:$0xf0] %vm65, %v300
  %307 = vst [vmem:[%s294 + $0x8] sm:$0xf0] %v303
  %308 = vst.msk [vmem:[%s294] sm:$0xf0] %vm68, 0.0
  %309 = vrot.lane.b32.xlu0 %v282, 15
  %v310 = vpop.permute.xlu0 %309
  %311 = vrot.lane.b32.xlu0 %v284, 15
  %v312 = vpop.permute.xlu0 %311
  %v313 = vsel %vm86, %v310, %v312
  %v316 = vsel %vm80, %v310, 0.0
  %v317 = vsel %vm81, %v313, 0.0
  %318 = vst.msk [vmem:[%s294 + $0x10] sm:$0xf] %vm92, %v316
  %319 = vst [vmem:[%s294 + $0x18] sm:$0xf] %v317
  %320 = vst.msk [vmem:[%s294 + $0x10] sm:$0xf] %vm95, 0.0
  %321 = vrot.lane.b32.xlu0 %v282, 1
  %v322 = vpop.permute.xlu0 %321
  %323 = vrot.lane.b32.xlu0 %v284, 1
  %v324 = vpop.permute.xlu0 %323
  %v325 = vsel %vm101, %v322, %v324
  %v328 = vsel %vm37, %v322, 0.0
  %v329 = vsel %vm38, %v325, 0.0
  %v332 = vrot.slane %v328, 4
  %v333 = vrot.slane %v329, 4
  %336 = vst.msk [vmem:[%s294 + $0x10] sm:$0xf0] %vm113, %v332
  %337 = vst [vmem:[%s294 + $0x18] sm:$0xf0] %v333
  %338 = vst.msk [vmem:[%s294 + $0x10] sm:$0xf0] %vm116, 0.0
  %340 = vst [vmem:[%s294 + $0x20] sm:$0xf] %v282
  %341 = vst [vmem:[%s294 + $0x28] sm:$0xf] %v284
  %342 = vrot.lane.b32.xlu0 %v282, 127
  %v343 = vpop.permute.xlu0 %342
  %344 = vrot.lane.b32.xlu0 %v284, 127
  %v345 = vpop.permute.xlu0 %344
  %v346 = vsel %vm125, %v343, %v345
  %v349 = vsel %vm80, %v346, 0.0
  %v350 = vsel %vm81, %v345, 0.0
  %v353 = vrot.slane %v349, 4
  %v354 = vrot.slane %v350, 4
  %357 = vst [vmem:[%s294 + $0x20] sm:$0xf0] %v353
  %358 = vst.msk [vmem:[%s294 + $0x28] sm:$0xf0] %vm138, %v354
  %359 = vst.msk [vmem:[%s294 + $0x28] sm:$0xf0] %vm140, 0.0
  %360 = vrot.lane.b32.xlu0 %v282, 113
  %v361 = vpop.permute.xlu0 %360
  %362 = vrot.lane.b32.xlu0 %v284, 113
  %v363 = vpop.permute.xlu0 %362
  %v364 = vsel %vm146, %v361, %v363
  %v367 = vsel %vm37, %v364, 0.0
  %v368 = vsel %vm38, %v363, 0.0
  %369 = vst [vmem:[%s294 + $0x30] sm:$0xf] %v367
  %370 = vst.msk [vmem:[%s294 + $0x38] sm:$0xf] %vm153, %v368
  %371 = vst.msk [vmem:[%s294 + $0x38] sm:$0xf] %vm155, 0.0
  %372 = vrot.lane.b32.xlu0 %v298, 112
  %v373 = vpop.permute.xlu0 %372
  %374 = vrot.lane.b32.xlu0 %v282, 112
  %v375 = vpop.permute.xlu0 %374
  %v376 = vsel %vm161, %v373, %v375
  %379 = vst [vmem:[%s294 + $0x30] sm:$0xf0] %v376
  %380 = vst.msk [vmem:[%s294 + $0x38] sm:$0xf0] %vm166, %v375
  %381 = vst.msk [vmem:[%s294 + $0x38] sm:$0xf0] %vm168, 0.0
  %382 = vrot.lane.b32.xlu0 %v282, 111
  %v383 = vpop.permute.xlu0 %382
  %384 = vrot.lane.b32.xlu0 %v284, 111
  %v385 = vpop.permute.xlu0 %384
  %v386 = vsel %vm174, %v383, %v385
  %v389 = vsel %vm80, %v386, 0.0
  %v390 = vsel %vm81, %v385, 0.0
  %391 = vst [vmem:[%s294 + $0x40] sm:$0xf] %v389
  %392 = vst.msk [vmem:[%s294 + $0x48] sm:$0xf] %vm181, %v390
  %393 = vst.msk [vmem:[%s294 + $0x48] sm:$0xf] %vm183, 0.0
  %v394 = vld [vmem:[%s294] sm:$0xff]
  %v395 = vld [vmem:[%s294 + $0x8] sm:$0xff]
  %v396 = vld [vmem:[%s294 + $0x10] sm:$0xff]
  %v397 = vld [vmem:[%s294 + $0x18] sm:$0xff]
  %v398 = vld [vmem:[%s294 + $0x20] sm:$0xff]
  %v399 = vld [vmem:[%s294 + $0x28] sm:$0xff]
  %v400 = vld [vmem:[%s294 + $0x30] sm:$0xff]
  %v401 = vld [vmem:[%s294 + $0x38] sm:$0xff]
  %v402 = vld [vmem:[%s294 + $0x40] sm:$0xf]
  %v403 = vld [vmem:[%s294 + $0x48] sm:$0xf]
  %v405 = vsel %vm199, %v402, 0
  %v408 = vsel %vm199, %v403, 0
  %410 = vmatprep.subr.mxu0 %v395
  %411 = vmatpush1.msra.mxu0 %v394
  %412 = vmatprep.subr.mxu0 %v397
  %413 = vmatpush1.msra.mxu0 %v396
  %414 = vmatprep.subr.mxu0 %v399
  %415 = vmatpush1.msra.mxu0 %v398
  %416 = vmatprep.subr.mxu0 %v401
  %417 = vmatpush1.msra.mxu0 %v400
  %418 = vmatprep.subr.mxu0 %v408
  %419 = vmatpush1.msra.mxu0 %v405
  %420 = vmatprep.subr.mxu0 0.0
  %421 = vmatpush1.msra.mxu0 0.0
  %422 = vmatprep.subr.mxu0 0.0
  %423 = vmatpush1.msra.mxu0 0.0
  %424 = vmatprep.subr.mxu0 0.0
  %425 = vmatpush1.msra.mxu0 0.0
  %426 = vmatprep.subr.mxu0 0.0
  %427 = vmatpush1.msra.mxu0 0.0
  %428 = vmatprep.subr.mxu0 0.0
  %429 = vmatpush1.msra.mxu0 0.0
  %430 = vmatprep.subr.mxu0 0.0
  %431 = vmatpush1.msra.mxu0 0.0
  %432 = vmatprep.subr.mxu0 0.0
  %433 = vmatpush1.msra.mxu0 0.0
  %434 = vmatprep.subr.mxu0 0.0
  %435 = vmatpush1.msra.mxu0 0.0
  %436 = vmatprep.subr.mxu0 0.0
  %437 = vmatpush1.msra.mxu0 0.0
  %438 = vmatprep.subr.mxu0 0.0
  %439 = vmatpush1.msra.mxu0 0.0
  %440 = vmatprep.subr.mxu0 0.0
  %441 = vmatpush1.msra.mxu0 0.0
  %442 = vmatprep.subr.mxu0 0.0
  %443 = vmatpush1.msra.mxu0 0.0
  %444 = vmatprep.subr.mxu0 0.0
  %445 = vmatpush1.msra.mxu0 0.0
  %446 = vmatprep.subr.mxu0 0.0
  %447 = vmatpush1.msra.mxu0 0.0
  %448 = vmatprep.subr.mxu0 0.0
  %449 = vmatpush1.msra.mxu0 0.0
  %450 = vmatprep.subr.mxu0 0.0
  %451 = vmatpush1.msra.mxu0 0.0
  %452 = vmatprep.subr.mxu0 0.0
  %453 = vmatpush1.msra.mxu0 0.0
  %454 = vmatprep.subr.mxu0 0.0
  %455 = vmatpush1.msra.mxu0 0.0
  %456 = vmatprep.subr.mxu0 0.0
  %457 = vmatpush1.msra.mxu0 0.0
  %458 = vmatprep.subr.mxu0 0.0
  %459 = vmatpush1.msra.mxu0 0.0
  %460 = vmatprep.subr.mxu0 0.0
  %461 = vmatpush1.msra.mxu0 0.0
  %462 = vmatprep.subr.mxu0 0.0
  %463 = vmatpush1.msra.mxu0 0.0
  %464 = vmatprep.subr.mxu0 0.0
  %465 = vmatpush1.msra.mxu0 0.0
  %466 = vmatprep.subr.mxu0 0.0
  %467 = vmatpush1.msra.mxu0 0.0
  %468 = vmatprep.subr.mxu0 0.0
  %469 = vmatpush1.msra.mxu0 0.0
  %470 = vmatprep.subr.mxu0 0.0
  %471 = vmatpush1.msra.mxu0 0.0
  %472 = vmatprep.subr.mxu0 0.0
  %473 = vmatpush1.msra.mxu0 0.0
  %474 = vmatprep.mubr.f32.mxu0 0.0
  %475 = vmatmul.mubr.f32.gmra.mrb[0].mxu0 %v197
  %v476 = vpop.f32.mrb[0].mxu0
  %v477 = vadd.f32 %v24, %v476
  %v478 = vpop.f32.mrb[0].mxu0
  %v479 = vadd.f32 %v24, %v478
  %480 = vdwg.mxu0
  %v481 = vmax.f32 %v477, 0.0
  %v482 = vmax.f32 %v479, 0.0
  %s483 = scalar_lea.vmem %s3, 16
  %484 = vst [vmem:[%s483] sm:$0xff] %v481
  %485 = vst [vmem:[%s483 + $0x8] sm:$0xff] %v482
  // Predicated region
  $region14: #{decoder_module_forward.1} parent=0 // pred_check
    _
  $region15: #{decoder_module_forward.1} parent=0 // pred_check_branch
    %487 = sbr.rel (0) target = $region17
  $region16: #{decoder_module_forward.1} parent=0 // pred_region
    _
  $region17: #{decoder_module_forward.1} parent=0 // pred_fallthru
    _
  // Predicated region
  $region18: #{decoder_module_forward.1} parent=0 // pred_check
    _
  $region19: #{decoder_module_forward.1} parent=0 // pred_check_branch
    %489 = sbr.rel (0) target = $region21
  $region20: #{decoder_module_forward.1} parent=0 // pred_region
    _
  $region21: #{decoder_module_forward.1} parent=0 // pred_fallthru
    _

</llo_original>
